<compile_context>
chip_gen: v6e
topology: v6e:2x2x1
jax: 0.10.0
libtpu: 0.0.40
codegen_flags: <defaults>
</compile_context>

<pallas_src>
import functools

import jax
import jax.numpy as jnp
from jax.experimental import pallas as pl
from jax.experimental.pallas import tpu as pltpu

LANE = 128


def _round_up(x, m):
    return ((x + m - 1) // m) * m


def fused_graphsage_kernel(adj_ref, inv_deg_ref, h_ref, *refs,
                           n_layers_total):
    """All SAGEConv layers fused: adjacency / features loaded once, static loop."""
    out_ref = refs[-1]
    adj = adj_ref[...]                               # (N, N) bf16, binary 0/1
    inv_deg = inv_deg_ref[...]                       # (N, 1) f32
    h = h_ref[...]                                   # (N, p_in0) f32

    for layer in range(n_layers_total):
        w_self_ref = refs[3 * layer]                 # (p_in, p_out) bf16
        w_neigh_ref = refs[3 * layer + 1]            # (p_in, p_out) bf16
        b_ref = refs[3 * layer + 2]                  # (1, p_out) f32

        h_bf = h.astype(jnp.bfloat16)
        # Mean aggregation: binary bf16 adj @ bf16 h -> f32 accumulate, then an
        # exact per-row 1/max(deg,1) scale in f32.
        h_sum = jnp.dot(adj, h_bf, preferred_element_type=jnp.float32)
        h_neigh = h_sum * inv_deg                    # (N, p_in) f32

        # Projection: two dots accumulated in f32 (no concat copy).
        out = (jnp.dot(h_bf, w_self_ref[...],
                       preferred_element_type=jnp.float32)
               + jnp.dot(h_neigh.astype(jnp.bfloat16), w_neigh_ref[...],
                         preferred_element_type=jnp.float32)
               + b_ref[...])                         # (1, p_out) broadcasts

        if layer < n_layers_total - 1:
            out = jnp.maximum(out, 0.0)              # relu on hidden layers
        h = out

    out_ref[...] = h.astype(out_ref.dtype)


def graphsage_forward(adj, features, params):
    """Stack of SAGEConv layers in one pallas_call; relu on all but the last."""
    n_nodes, in_feats = features.shape
    out_dim = params[-1][0].shape[1]
    n_layers_total = len(params)

    # Binary bf16 adjacency + f32 per-row inverse in-degree (post-scale).
    deg = jnp.sum(adj, axis=-1, keepdims=True)
    inv_deg = (1.0 / jnp.maximum(deg, 1.0)).astype(jnp.float32)     # (N, 1)
    adj_bf = adj.astype(jnp.bfloat16)

    # Lane-pad the input features (extra zero columns are inert).
    p_in0 = _round_up(in_feats, LANE)
    h0 = jnp.zeros((n_nodes, p_in0), jnp.float32)
    h0 = h0.at[:, :in_feats].set(features)

    # Per-layer padded weights / biases as separate refs (layer count is static).
    flat_inputs = [adj_bf, inv_deg, h0]
    for (w_self, w_neigh, bias) in params:
        f_in, f_out = w_self.shape
        pi, po = _round_up(f_in, LANE), _round_up(f_out, LANE)
        ws = jnp.zeros((pi, po), jnp.bfloat16)
        ws = ws.at[:f_in, :f_out].set(w_self.astype(jnp.bfloat16))
        wn = jnp.zeros((pi, po), jnp.bfloat16)
        wn = wn.at[:f_in, :f_out].set(w_neigh.astype(jnp.bfloat16))
        b = jnp.zeros((1, po), jnp.float32)
        b = b.at[0, :f_out].set(bias)
        flat_inputs += [ws, wn, b]

    p_out_last = _round_up(out_dim, LANE)

    def _spec(shape):
        # Whole-array block, single grid step, no useless double buffer.
        return pl.BlockSpec(shape, lambda i: (0,) * len(shape),
                            pipeline_mode=pl.Buffered(1))

    in_specs = [_spec(a.shape) for a in flat_inputs]

    # Explicit scoped-VMEM limit sized from the actual resident footprint
    # (inputs + output + headroom), capped below v7x's 64 MiB physical VMEM.
    resident_bytes = sum(int(a.size) * a.dtype.itemsize for a in flat_inputs)
    resident_bytes += n_nodes * p_out_last * 4
    vmem_limit = int(min(max(2 * resident_bytes + (2 << 20), 16 << 20),
                         56 << 20))

    kernel = functools.partial(fused_graphsage_kernel,
                               n_layers_total=n_layers_total)

    out_padded = pl.pallas_call(
        kernel,
        out_shape=jax.ShapeDtypeStruct((n_nodes, p_out_last), jnp.float32),
        grid=(1,),
        in_specs=in_specs,
        out_specs=pl.BlockSpec((n_nodes, p_out_last), lambda i: (0, 0)),
        compiler_params=pltpu.CompilerParams(
            dimension_semantics=("arbitrary",),
            vmem_limit_bytes=vmem_limit),
    )(*flat_inputs)

    # Slice the lane-padded logits back to the real output width.
    return out_padded[:, :out_dim]


def init_sage_params(key, in_feats, n_hidden, out_dim, n_layers):
    """Deterministic parameter init mirroring the torch module's layer stack."""
    dims = [(in_feats, n_hidden)]
    for _ in range(n_layers - 1):
        dims.append((n_hidden, n_hidden))
    dims.append((n_hidden, out_dim))

    params = []
    for (f_in, f_out) in dims:
        key, k1, k2, k3 = jax.random.split(key, 4)
        scale = 1.0 / jnp.sqrt(jnp.float32(f_in))
        w_self = jax.random.uniform(k1, (f_in, f_out), jnp.float32, -scale, scale)
        w_neigh = jax.random.uniform(k2, (f_in, f_out), jnp.float32, -scale, scale)
        bias = jax.random.uniform(k3, (f_out,), jnp.float32, -scale, scale)
        params.append((w_self, w_neigh, bias))
    return params


if __name__ == "__main__":
    key = jax.random.PRNGKey(0)

    # Small synthetic graph: 16 nodes, 8 input feats, 32 hidden, 4 output classes,
    # n_layers=2  ->  SAGEConv(8,32) -> SAGEConv(32,32) -> SAGEConv(32,4)
    n_nodes, in_feats, n_hidden, out_dim, n_layers = 16, 8, 32, 4, 2

    key, k_adj, k_feat, k_param = jax.random.split(key, 4)

    # Dense adjacency: adj[dst, src] = 1.0 for an edge src -> dst (~30% density).
    adj = (jax.random.uniform(k_adj, (n_nodes, n_nodes)) < 0.3).astype(jnp.float32)

    features = jax.random.normal(k_feat, (n_nodes, in_feats), jnp.float32)

    params = init_sage_params(k_param, in_feats, n_hidden, out_dim, n_layers)

    out = graphsage_forward(adj, features, params)
    out = jax.block_until_ready(out)

    assert out.shape == (n_nodes, out_dim), out.shape
    assert out.dtype == jnp.float32
    print("KERNEL_OK")
</pallas_src>

<mosaic_0001>
module attributes {stable_mosaic.version = 11 : i64} {
  func.func @fused_graphsage_kernel(%arg0: i32, %arg1: memref<16x16xbf16, #tpu.memory_space<vmem>>, %arg2: memref<16x1xf32, #tpu.memory_space<vmem>>, %arg3: memref<16x128xf32, #tpu.memory_space<vmem>>, %arg4: memref<128x128xbf16, #tpu.memory_space<vmem>>, %arg5: memref<128x128xbf16, #tpu.memory_space<vmem>>, %arg6: memref<1x128xf32, #tpu.memory_space<vmem>>, %arg7: memref<128x128xbf16, #tpu.memory_space<vmem>>, %arg8: memref<128x128xbf16, #tpu.memory_space<vmem>>, %arg9: memref<1x128xf32, #tpu.memory_space<vmem>>, %arg10: memref<128x128xbf16, #tpu.memory_space<vmem>>, %arg11: memref<128x128xbf16, #tpu.memory_space<vmem>>, %arg12: memref<1x128xf32, #tpu.memory_space<vmem>>, %arg13: memref<16x128xf32, #tpu.memory_space<vmem>>) attributes {dimension_semantics = [#tpu.dimension_semantics<arbitrary>], iteration_bounds = array<i64: 1>, scalar_prefetch = 0 : i64, scratch_operands = 0 : i64, tpu.core_type = #tpu.core_type<tc>, window_params = [{pipeline_mode = #tpu.pipeline_mode<synchronous>, transform_indices = @transform_0, window_bounds = array<i64: 16, 16>}, {pipeline_mode = #tpu.pipeline_mode<synchronous>, transform_indices = @transform_1, window_bounds = array<i64: 16, 1>}, {pipeline_mode = #tpu.pipeline_mode<synchronous>, transform_indices = @transform_2, window_bounds = array<i64: 16, 128>}, {pipeline_mode = #tpu.pipeline_mode<synchronous>, transform_indices = @transform_3, window_bounds = array<i64: 128, 128>}, {pipeline_mode = #tpu.pipeline_mode<synchronous>, transform_indices = @transform_4, window_bounds = array<i64: 128, 128>}, {pipeline_mode = #tpu.pipeline_mode<synchronous>, transform_indices = @transform_5, window_bounds = array<i64: 1, 128>}, {pipeline_mode = #tpu.pipeline_mode<synchronous>, transform_indices = @transform_6, window_bounds = array<i64: 128, 128>}, {pipeline_mode = #tpu.pipeline_mode<synchronous>, transform_indices = @transform_7, window_bounds = array<i64: 128, 128>}, {pipeline_mode = #tpu.pipeline_mode<synchronous>, transform_indices = @transform_8, window_bounds = array<i64: 1, 128>}, {pipeline_mode = #tpu.pipeline_mode<synchronous>, transform_indices = @transform_9, window_bounds = array<i64: 128, 128>}, {pipeline_mode = #tpu.pipeline_mode<synchronous>, transform_indices = @transform_10, window_bounds = array<i64: 128, 128>}, {pipeline_mode = #tpu.pipeline_mode<synchronous>, transform_indices = @transform_11, window_bounds = array<i64: 1, 128>}, {pipeline_mode = #tpu.pipeline_mode<synchronous>, transform_indices = @transform_12, window_bounds = array<i64: 16, 128>}]} {
    %c0 = arith.constant 0 : index
    %c0_0 = arith.constant 0 : index
    %0 = vector.load %arg1[%c0, %c0_0] : memref<16x16xbf16, #tpu.memory_space<vmem>>, vector<16x16xbf16>
    %c0_1 = arith.constant 0 : index
    %c0_2 = arith.constant 0 : index
    %1 = vector.load %arg2[%c0_1, %c0_2] : memref<16x1xf32, #tpu.memory_space<vmem>>, vector<16x1xf32>
    %c0_3 = arith.constant 0 : index
    %c0_4 = arith.constant 0 : index
    %2 = vector.load %arg3[%c0_3, %c0_4] : memref<16x128xf32, #tpu.memory_space<vmem>>, vector<16x128xf32>
    %3 = arith.truncf %2 : vector<16x128xf32> to vector<16x128xbf16>
    %cst = arith.constant dense<0.000000e+00> : vector<16x128xf32>
    %4 = tpu.matmul %0, %3, %cst {dimension_numbers = #tpu.dot_dimension_numbers<[1], [0], [0], [1], [0, 0, 1, 1], [], []>} : vector<16x16xbf16>, vector<16x128xbf16>, vector<16x128xf32> -> vector<16x128xf32>
    %5 = vector.broadcast %1 : vector<16x1xf32> to vector<16x128xf32>
    %6 = arith.mulf %4, %5 : vector<16x128xf32>
    %c0_5 = arith.constant 0 : index
    %c0_6 = arith.constant 0 : index
    %7 = vector.load %arg4[%c0_5, %c0_6] : memref<128x128xbf16, #tpu.memory_space<vmem>>, vector<128x128xbf16>
    %cst_7 = arith.constant dense<0.000000e+00> : vector<16x128xf32>
    %8 = tpu.matmul %3, %7, %cst_7 {dimension_numbers = #tpu.dot_dimension_numbers<[1], [0], [0], [1], [0, 0, 1, 1], [], []>} : vector<16x128xbf16>, vector<128x128xbf16>, vector<16x128xf32> -> vector<16x128xf32>
    %9 = arith.truncf %6 : vector<16x128xf32> to vector<16x128xbf16>
    %c0_8 = arith.constant 0 : index
    %c0_9 = arith.constant 0 : index
    %10 = vector.load %arg5[%c0_8, %c0_9] : memref<128x128xbf16, #tpu.memory_space<vmem>>, vector<128x128xbf16>
    %cst_10 = arith.constant dense<0.000000e+00> : vector<16x128xf32>
    %11 = tpu.matmul %9, %10, %cst_10 {dimension_numbers = #tpu.dot_dimension_numbers<[1], [0], [0], [1], [0, 0, 1, 1], [], []>} : vector<16x128xbf16>, vector<128x128xbf16>, vector<16x128xf32> -> vector<16x128xf32>
    %12 = arith.addf %8, %11 : vector<16x128xf32>
    %c0_11 = arith.constant 0 : index
    %c0_12 = arith.constant 0 : index
    %13 = vector.load %arg6[%c0_11, %c0_12] : memref<1x128xf32, #tpu.memory_space<vmem>>, vector<1x128xf32>
    %14 = vector.broadcast %13 : vector<1x128xf32> to vector<16x128xf32>
    %15 = arith.addf %12, %14 : vector<16x128xf32>
    %cst_13 = arith.constant 0.000000e+00 : f32
    %16 = vector.broadcast %cst_13 : f32 to vector<16x128xf32>
    %17 = arith.maximumf %15, %16 : vector<16x128xf32>
    %18 = arith.truncf %17 : vector<16x128xf32> to vector<16x128xbf16>
    %cst_14 = arith.constant dense<0.000000e+00> : vector<16x128xf32>
    %19 = tpu.matmul %0, %18, %cst_14 {dimension_numbers = #tpu.dot_dimension_numbers<[1], [0], [0], [1], [0, 0, 1, 1], [], []>} : vector<16x16xbf16>, vector<16x128xbf16>, vector<16x128xf32> -> vector<16x128xf32>
    %20 = vector.broadcast %1 : vector<16x1xf32> to vector<16x128xf32>
    %21 = arith.mulf %19, %20 : vector<16x128xf32>
    %c0_15 = arith.constant 0 : index
    %c0_16 = arith.constant 0 : index
    %22 = vector.load %arg7[%c0_15, %c0_16] : memref<128x128xbf16, #tpu.memory_space<vmem>>, vector<128x128xbf16>
    %cst_17 = arith.constant dense<0.000000e+00> : vector<16x128xf32>
    %23 = tpu.matmul %18, %22, %cst_17 {dimension_numbers = #tpu.dot_dimension_numbers<[1], [0], [0], [1], [0, 0, 1, 1], [], []>} : vector<16x128xbf16>, vector<128x128xbf16>, vector<16x128xf32> -> vector<16x128xf32>
    %24 = arith.truncf %21 : vector<16x128xf32> to vector<16x128xbf16>
    %c0_18 = arith.constant 0 : index
    %c0_19 = arith.constant 0 : index
    %25 = vector.load %arg8[%c0_18, %c0_19] : memref<128x128xbf16, #tpu.memory_space<vmem>>, vector<128x128xbf16>
    %cst_20 = arith.constant dense<0.000000e+00> : vector<16x128xf32>
    %26 = tpu.matmul %24, %25, %cst_20 {dimension_numbers = #tpu.dot_dimension_numbers<[1], [0], [0], [1], [0, 0, 1, 1], [], []>} : vector<16x128xbf16>, vector<128x128xbf16>, vector<16x128xf32> -> vector<16x128xf32>
    %27 = arith.addf %23, %26 : vector<16x128xf32>
    %c0_21 = arith.constant 0 : index
    %c0_22 = arith.constant 0 : index
    %28 = vector.load %arg9[%c0_21, %c0_22] : memref<1x128xf32, #tpu.memory_space<vmem>>, vector<1x128xf32>
    %29 = vector.broadcast %28 : vector<1x128xf32> to vector<16x128xf32>
    %30 = arith.addf %27, %29 : vector<16x128xf32>
    %cst_23 = arith.constant 0.000000e+00 : f32
    %31 = vector.broadcast %cst_23 : f32 to vector<16x128xf32>
    %32 = arith.maximumf %30, %31 : vector<16x128xf32>
    %33 = arith.truncf %32 : vector<16x128xf32> to vector<16x128xbf16>
    %cst_24 = arith.constant dense<0.000000e+00> : vector<16x128xf32>
    %34 = tpu.matmul %0, %33, %cst_24 {dimension_numbers = #tpu.dot_dimension_numbers<[1], [0], [0], [1], [0, 0, 1, 1], [], []>} : vector<16x16xbf16>, vector<16x128xbf16>, vector<16x128xf32> -> vector<16x128xf32>
    %35 = vector.broadcast %1 : vector<16x1xf32> to vector<16x128xf32>
    %36 = arith.mulf %34, %35 : vector<16x128xf32>
    %c0_25 = arith.constant 0 : index
    %c0_26 = arith.constant 0 : index
    %37 = vector.load %arg10[%c0_25, %c0_26] : memref<128x128xbf16, #tpu.memory_space<vmem>>, vector<128x128xbf16>
    %cst_27 = arith.constant dense<0.000000e+00> : vector<16x128xf32>
    %38 = tpu.matmul %33, %37, %cst_27 {dimension_numbers = #tpu.dot_dimension_numbers<[1], [0], [0], [1], [0, 0, 1, 1], [], []>} : vector<16x128xbf16>, vector<128x128xbf16>, vector<16x128xf32> -> vector<16x128xf32>
    %39 = arith.truncf %36 : vector<16x128xf32> to vector<16x128xbf16>
    %c0_28 = arith.constant 0 : index
    %c0_29 = arith.constant 0 : index
    %40 = vector.load %arg11[%c0_28, %c0_29] : memref<128x128xbf16, #tpu.memory_space<vmem>>, vector<128x128xbf16>
    %cst_30 = arith.constant dense<0.000000e+00> : vector<16x128xf32>
    %41 = tpu.matmul %39, %40, %cst_30 {dimension_numbers = #tpu.dot_dimension_numbers<[1], [0], [0], [1], [0, 0, 1, 1], [], []>} : vector<16x128xbf16>, vector<128x128xbf16>, vector<16x128xf32> -> vector<16x128xf32>
    %42 = arith.addf %38, %41 : vector<16x128xf32>
    %c0_31 = arith.constant 0 : index
    %c0_32 = arith.constant 0 : index
    %43 = vector.load %arg12[%c0_31, %c0_32] : memref<1x128xf32, #tpu.memory_space<vmem>>, vector<1x128xf32>
    %44 = vector.broadcast %43 : vector<1x128xf32> to vector<16x128xf32>
    %45 = arith.addf %42, %44 : vector<16x128xf32>
    %c0_33 = arith.constant 0 : index
    %c0_34 = arith.constant 0 : index
    %46 = vector.load %arg13[%c0_33, %c0_34] : memref<16x128xf32, #tpu.memory_space<vmem>>, vector<16x128xf32>
    tpu.vector_store %arg13[%c0_33, %c0_34], %45 {strides = array<i32>} : memref<16x128xf32, #tpu.memory_space<vmem>>, vector<16x128xf32>,
    return
  }
  func.func @transform_0(%arg0: i32) -> (i32, i32) {
    %c0_i32 = arith.constant 0 : i32
    %c0_i32_0 = arith.constant 0 : i32
    %c0_i32_1 = arith.constant 0 : i32
    return %c0_i32, %c0_i32_0 : i32, i32
  }
  func.func @transform_1(%arg0: i32) -> (i32, i32) {
    %c0_i32 = arith.constant 0 : i32
    %c0_i32_0 = arith.constant 0 : i32
    %c0_i32_1 = arith.constant 0 : i32
    return %c0_i32, %c0_i32_0 : i32, i32
  }
  func.func @transform_2(%arg0: i32) -> (i32, i32) {
    %c0_i32 = arith.constant 0 : i32
    %c0_i32_0 = arith.constant 0 : i32
    %c0_i32_1 = arith.constant 0 : i32
    return %c0_i32, %c0_i32_0 : i32, i32
  }
  func.func @transform_3(%arg0: i32) -> (i32, i32) {
    %c0_i32 = arith.constant 0 : i32
    %c0_i32_0 = arith.constant 0 : i32
    %c0_i32_1 = arith.constant 0 : i32
    return %c0_i32, %c0_i32_0 : i32, i32
  }
  func.func @transform_4(%arg0: i32) -> (i32, i32) {
    %c0_i32 = arith.constant 0 : i32
    %c0_i32_0 = arith.constant 0 : i32
    %c0_i32_1 = arith.constant 0 : i32
    return %c0_i32, %c0_i32_0 : i32, i32
  }
  func.func @transform_5(%arg0: i32) -> (i32, i32) {
    %c0_i32 = arith.constant 0 : i32
    %c0_i32_0 = arith.constant 0 : i32
    %c0_i32_1 = arith.constant 0 : i32
    return %c0_i32, %c0_i32_0 : i32, i32
  }
  func.func @transform_6(%arg0: i32) -> (i32, i32) {
    %c0_i32 = arith.constant 0 : i32
    %c0_i32_0 = arith.constant 0 : i32
    %c0_i32_1 = arith.constant 0 : i32
    return %c0_i32, %c0_i32_0 : i32, i32
  }
  func.func @transform_7(%arg0: i32) -> (i32, i32) {
    %c0_i32 = arith.constant 0 : i32
    %c0_i32_0 = arith.constant 0 : i32
    %c0_i32_1 = arith.constant 0 : i32
    return %c0_i32, %c0_i32_0 : i32, i32
  }
  func.func @transform_8(%arg0: i32) -> (i32, i32) {
    %c0_i32 = arith.constant 0 : i32
    %c0_i32_0 = arith.constant 0 : i32
    %c0_i32_1 = arith.constant 0 : i32
    return %c0_i32, %c0_i32_0 : i32, i32
  }
  func.func @transform_9(%arg0: i32) -> (i32, i32) {
    %c0_i32 = arith.constant 0 : i32
    %c0_i32_0 = arith.constant 0 : i32
    %c0_i32_1 = arith.constant 0 : i32
    return %c0_i32, %c0_i32_0 : i32, i32
  }
  func.func @transform_10(%arg0: i32) -> (i32, i32) {
    %c0_i32 = arith.constant 0 : i32
    %c0_i32_0 = arith.constant 0 : i32
    %c0_i32_1 = arith.constant 0 : i32
    return %c0_i32, %c0_i32_0 : i32, i32
  }
  func.func @transform_11(%arg0: i32) -> (i32, i32) {
    %c0_i32 = arith.constant 0 : i32
    %c0_i32_0 = arith.constant 0 : i32
    %c0_i32_1 = arith.constant 0 : i32
    return %c0_i32, %c0_i32_0 : i32, i32
  }
  func.func @transform_12(%arg0: i32) -> (i32, i32) {
    %c0_i32 = arith.constant 0 : i32
    %c0_i32_0 = arith.constant 0 : i32
    %c0_i32_1 = arith.constant 0 : i32
    return %c0_i32, %c0_i32_0 : i32, i32
  }
}

</mosaic_0001>

<llo_original>
// kernel: tpu_custom_call.1
$region0: #{tpu_custom_call.1}
  #allocation0 [shape = 'u32[]', space=smem, size = 0x4, offset = 0x4, fixed_abs, tag = 'smem constant byte address 0x4 - core index']
  #allocation1 [shape = 'u32[144,128]{1,0:T(1,128)}', space=vmem, size = 0x12000, scoped, tag = 'internal scratch']
  %s0 = inlined_call_operand.hbm [shape: bf16[16,16], index: 0, kind: input, shape index: {}]
  %s1 = inlined_call_operand.vmem [shape: f32[16,1], index: 1, kind: input, shape index: {}]
  %s2 = inlined_call_operand.vmem [shape: f32[16,128], index: 2, kind: input, shape index: {}]
  %s3 = inlined_call_operand.hbm [shape: bf16[128,128], index: 3, kind: input, shape index: {}]
  %s4 = inlined_call_operand.hbm [shape: bf16[128,128], index: 4, kind: input, shape index: {}]
  %s5 = inlined_call_operand.vmem [shape: f32[1,128], index: 5, kind: input, shape index: {}]
  %s6 = inlined_call_operand.hbm [shape: bf16[128,128], index: 6, kind: input, shape index: {}]
  %s7 = inlined_call_operand.hbm [shape: bf16[128,128], index: 7, kind: input, shape index: {}]
  %s8 = inlined_call_operand.vmem [shape: f32[1,128], index: 8, kind: input, shape index: {}]
  %s9 = inlined_call_operand.hbm [shape: bf16[128,128], index: 9, kind: input, shape index: {}]
  %s10 = inlined_call_operand.hbm [shape: bf16[128,128], index: 10, kind: input, shape index: {}]
  %s11 = inlined_call_operand.vmem [shape: f32[1,128], index: 11, kind: input, shape index: {}]
  %s12 = inlined_call_operand.hbm [shape: f32[16,128], index: 12, kind: output, shape index: {}]
  %s13 = sld [smem:[#allocation0]]
  $region86: #{tpu_custom_call.1} parent=0
    _
  %s15 = ssub.s32 1, %s13
  %s16 = scalar_select 0, %s15, %s13
  $region1: #{tpu_custom_call.1} parent=0
    #allocation2 [shape = 'u8[4096]{0}', space=vmem, size = 0x1000, scoped, tag = 'input window, operand 0, single buffered']
    #allocation3 [shape = 's32[1]{0}', space=sflag, size = 0x4, scoped, tag = 'scoped memory for tpu_custom_call.1']
    #allocation4 [shape = 's32[1]{0}', space=sflag, size = 0x4, scoped, tag = 'scoped memory for tpu_custom_call.1']
    #allocation5 [shape = 'u8[32768]{0}', space=vmem, size = 0x8000, scoped, tag = 'input window, operand 3, single buffered']
    #allocation6 [shape = 's32[1]{0}', space=sflag, size = 0x4, scoped, tag = 'scoped memory for tpu_custom_call.1']
    #allocation7 [shape = 'u8[32768]{0}', space=vmem, size = 0x8000, scoped, tag = 'input window, operand 4, single buffered']
    #allocation8 [shape = 'u8[32768]{0}', space=vmem, size = 0x8000, scoped, tag = 'input window, operand 6, single buffered']
    #allocation9 [shape = 's32[1]{0}', space=sflag, size = 0x4, scoped, tag = 'scoped memory for tpu_custom_call.1']
    #allocation10 [shape = 'u8[32768]{0}', space=vmem, size = 0x8000, scoped, tag = 'input window, operand 7, single buffered']
    #allocation11 [shape = 'u8[32768]{0}', space=vmem, size = 0x8000, scoped, tag = 'input window, operand 9, single buffered']
    #allocation12 [shape = 's32[1]{0}', space=sflag, size = 0x4, scoped, tag = 'scoped memory for tpu_custom_call.1']
    #allocation13 [shape = 'u8[32768]{0}', space=vmem, size = 0x8000, scoped, tag = 'input window, operand 10, single buffered']
    #allocation14 [shape = 'u8[8192]{0}', space=vmem, size = 0x2000, scoped, tag = 'output window, operand 0, single buffered']
    %17 = vsyncpa [#allocation3], 0
    %18 = vsyncpa [#allocation6], 0
    %19 = vsyncpa [#allocation9], 0
    %20 = vsyncpa [#allocation12], 0
    %21 = vsyncpa [#allocation4], 0
    // Predicated region
    $region2: #{tpu_custom_call.1} parent=1 // pred_check
      _
    $region3: #{tpu_custom_call.1} parent=1 // pred_check_branch
      %23 = sbr.rel (0) target = $region5
    $region4: #{tpu_custom_call.1} parent=1 // pred_region
      %s25 = ssub.s32 128, 128
      %26 = vsyncadd [#allocation3], %s25
      %s27 = sshll.u32 [#allocation2], 4
      %s28 = int_to_ptr.vmem [resolvable:$true] %s27
      %33 = dma.hbm_to_vmem [thread:$0]  %s0, 128, %s28, [#allocation3], 64, 64, 4
    $region5: #{tpu_custom_call.1} parent=1 // pred_fallthru
      _
    // Predicated region
    $region6: #{tpu_custom_call.1} parent=1 // pred_check
      _
    $region7: #{tpu_custom_call.1} parent=1 // pred_check_branch
      %35 = sbr.rel (0) target = $region9
    $region8: #{tpu_custom_call.1} parent=1 // pred_region
      _
    $region9: #{tpu_custom_call.1} parent=1 // pred_fallthru
      _
    // Predicated region
    $region10: #{tpu_custom_call.1} parent=1 // pred_check
      _
    $region11: #{tpu_custom_call.1} parent=1 // pred_check_branch
      %37 = sbr.rel (0) target = $region13
    $region12: #{tpu_custom_call.1} parent=1 // pred_region
      _
    $region13: #{tpu_custom_call.1} parent=1 // pred_fallthru
      _
    // Predicated region
    $region14: #{tpu_custom_call.1} parent=1 // pred_check
      _
    $region15: #{tpu_custom_call.1} parent=1 // pred_check_branch
      %39 = sbr.rel (0) target = $region17
    $region16: #{tpu_custom_call.1} parent=1 // pred_region
      %s41 = ssub.s32 1024, 1024
      %42 = vsyncadd [#allocation6], %s41
      %s43 = sshll.u32 [#allocation5], 4
      %s44 = int_to_ptr.vmem [resolvable:$true] %s43
      %49 = dma.hbm_to_vmem [thread:$0]  %s3, 1024, %s44, [#allocation6], 64, 64, 4
    $region17: #{tpu_custom_call.1} parent=1 // pred_fallthru
      _
    // Predicated region
    $region18: #{tpu_custom_call.1} parent=1 // pred_check
      _
    $region19: #{tpu_custom_call.1} parent=1 // pred_check_branch
      %51 = sbr.rel (0) target = $region21
    $region20: #{tpu_custom_call.1} parent=1 // pred_region
      %s53 = ssub.s32 1024, 1024
      %54 = vsyncadd [#allocation6], %s53
      %s55 = sshll.u32 [#allocation7], 4
      %s56 = int_to_ptr.vmem [resolvable:$true] %s55
      %61 = dma.hbm_to_vmem [thread:$0]  %s4, 1024, %s56, [#allocation6], 64, 64, 4
    $region21: #{tpu_custom_call.1} parent=1 // pred_fallthru
      _
    // Predicated region
    $region22: #{tpu_custom_call.1} parent=1 // pred_check
      _
    $region23: #{tpu_custom_call.1} parent=1 // pred_check_branch
      %63 = sbr.rel (0) target = $region25
    $region24: #{tpu_custom_call.1} parent=1 // pred_region
      _
    $region25: #{tpu_custom_call.1} parent=1 // pred_fallthru
      _
    // Predicated region
    $region26: #{tpu_custom_call.1} parent=1 // pred_check
      _
    $region27: #{tpu_custom_call.1} parent=1 // pred_check_branch
      %65 = sbr.rel (0) target = $region29
    $region28: #{tpu_custom_call.1} parent=1 // pred_region
      %s67 = ssub.s32 1024, 1024
      %68 = vsyncadd [#allocation9], %s67
      %s69 = sshll.u32 [#allocation8], 4
      %s70 = int_to_ptr.vmem [resolvable:$true] %s69
      %75 = dma.hbm_to_vmem [thread:$0]  %s6, 1024, %s70, [#allocation9], 64, 64, 4
    $region29: #{tpu_custom_call.1} parent=1 // pred_fallthru
      _
    // Predicated region
    $region30: #{tpu_custom_call.1} parent=1 // pred_check
      _
    $region31: #{tpu_custom_call.1} parent=1 // pred_check_branch
      %77 = sbr.rel (0) target = $region33
    $region32: #{tpu_custom_call.1} parent=1 // pred_region
      %s79 = ssub.s32 1024, 1024
      %80 = vsyncadd [#allocation9], %s79
      %s81 = sshll.u32 [#allocation10], 4
      %s82 = int_to_ptr.vmem [resolvable:$true] %s81
      %87 = dma.hbm_to_vmem [thread:$0]  %s7, 1024, %s82, [#allocation9], 64, 64, 4
    $region33: #{tpu_custom_call.1} parent=1 // pred_fallthru
      _
    // Predicated region
    $region34: #{tpu_custom_call.1} parent=1 // pred_check
      _
    $region35: #{tpu_custom_call.1} parent=1 // pred_check_branch
      %89 = sbr.rel (0) target = $region37
    $region36: #{tpu_custom_call.1} parent=1 // pred_region
      _
    $region37: #{tpu_custom_call.1} parent=1 // pred_fallthru
      _
    // Predicated region
    $region38: #{tpu_custom_call.1} parent=1 // pred_check
      _
    $region39: #{tpu_custom_call.1} parent=1 // pred_check_branch
      %91 = sbr.rel (0) target = $region41
    $region40: #{tpu_custom_call.1} parent=1 // pred_region
      %s93 = ssub.s32 1024, 1024
      %94 = vsyncadd [#allocation12], %s93
      %s95 = sshll.u32 [#allocation11], 4
      %s96 = int_to_ptr.vmem [resolvable:$true] %s95
      %101 = dma.hbm_to_vmem [thread:$0]  %s9, 1024, %s96, [#allocation12], 64, 64, 4
    $region41: #{tpu_custom_call.1} parent=1 // pred_fallthru
      _
    // Predicated region
    $region42: #{tpu_custom_call.1} parent=1 // pred_check
      _
    $region43: #{tpu_custom_call.1} parent=1 // pred_check_branch
      %103 = sbr.rel (0) target = $region45
    $region44: #{tpu_custom_call.1} parent=1 // pred_region
      %s105 = ssub.s32 1024, 1024
      %106 = vsyncadd [#allocation12], %s105
      %s107 = sshll.u32 [#allocation13], 4
      %s108 = int_to_ptr.vmem [resolvable:$true] %s107
      %113 = dma.hbm_to_vmem [thread:$0]  %s10, 1024, %s108, [#allocation12], 64, 64, 4
    $region45: #{tpu_custom_call.1} parent=1 // pred_fallthru
      _
    // Predicated region
    $region46: #{tpu_custom_call.1} parent=1 // pred_check
      _
    $region47: #{tpu_custom_call.1} parent=1 // pred_check_branch
      %115 = sbr.rel (0) target = $region49
    $region48: #{tpu_custom_call.1} parent=1 // pred_region
      _
    $region49: #{tpu_custom_call.1} parent=1 // pred_fallthru
      _
    // Predicated region
    $region50: #{tpu_custom_call.1} parent=1 // pred_check
      _
    $region51: #{tpu_custom_call.1} parent=1 // pred_check_branch
      %117 = sbr.rel (0) target = $region53
    $region52: #{tpu_custom_call.1} parent=1 // pred_region
      %118 = dma.done [#allocation3], 128
    $region53: #{tpu_custom_call.1} parent=1 // pred_fallthru
      _
    // Predicated region
    $region54: #{tpu_custom_call.1} parent=1 // pred_check
      _
    $region55: #{tpu_custom_call.1} parent=1 // pred_check_branch
      %120 = sbr.rel (0) target = $region57
    $region56: #{tpu_custom_call.1} parent=1 // pred_region
      %121 = dma.done [#allocation6], 1024
    $region57: #{tpu_custom_call.1} parent=1 // pred_fallthru
      _
    // Predicated region
    $region58: #{tpu_custom_call.1} parent=1 // pred_check
      _
    $region59: #{tpu_custom_call.1} parent=1 // pred_check_branch
      %123 = sbr.rel (0) target = $region61
    $region60: #{tpu_custom_call.1} parent=1 // pred_region
      %124 = dma.done [#allocation6], 1024
    $region61: #{tpu_custom_call.1} parent=1 // pred_fallthru
      _
    // Predicated region
    $region62: #{tpu_custom_call.1} parent=1 // pred_check
      _
    $region63: #{tpu_custom_call.1} parent=1 // pred_check_branch
      %126 = sbr.rel (0) target = $region65
    $region64: #{tpu_custom_call.1} parent=1 // pred_region
      %127 = dma.done [#allocation9], 1024
    $region65: #{tpu_custom_call.1} parent=1 // pred_fallthru
      _
    // Predicated region
    $region66: #{tpu_custom_call.1} parent=1 // pred_check
      _
    $region67: #{tpu_custom_call.1} parent=1 // pred_check_branch
      %129 = sbr.rel (0) target = $region69
    $region68: #{tpu_custom_call.1} parent=1 // pred_region
      %130 = dma.done [#allocation9], 1024
    $region69: #{tpu_custom_call.1} parent=1 // pred_fallthru
      _
    // Predicated region
    $region70: #{tpu_custom_call.1} parent=1 // pred_check
      _
    $region71: #{tpu_custom_call.1} parent=1 // pred_check_branch
      %132 = sbr.rel (0) target = $region73
    $region72: #{tpu_custom_call.1} parent=1 // pred_region
      %133 = dma.done [#allocation12], 1024
    $region73: #{tpu_custom_call.1} parent=1 // pred_fallthru
      _
    // Predicated region
    $region74: #{tpu_custom_call.1} parent=1 // pred_check
      _
    $region75: #{tpu_custom_call.1} parent=1 // pred_check_branch
      %135 = sbr.rel (0) target = $region77
    $region76: #{tpu_custom_call.1} parent=1 // pred_region
      %136 = dma.done [#allocation12], 1024
    $region77: #{tpu_custom_call.1} parent=1 // pred_fallthru
      _
    %v138 = vld [vmem:[#allocation2] sm:$0xf]
    %v139 = vld [vmem:[#allocation2 + $0x4] sm:$0xf]
    %v140 = vld [vmem:[%s1] sm:$0xff]
    %v141 = vld [vmem:[%s1 + $0x8] sm:$0xff]
    %v142 = vld [vmem:[%s2] sm:$0xff]
    %v143 = vld [vmem:[%s2 + $0x8] sm:$0xff]
    %v144 = vpack.c.bf16 %v143, %v142
    %v147 = vunpack.c.l.b16 %v138
    %v148 = vunpack.c.l.b16 %v139
    %v149 = vpack.c.b16 %v148, %v147
    %vm150 = vcmask 130048
    %v152 = vsel %vm150, %v149, 0
    %154 = vmatprep.subr.bf16.mxu0 0
    %155 = vmatpush1.bf16.msra.mxu0 0
    %156 = vmatprep.subr.bf16.mxu0 0
    %157 = vmatpush1.bf16.msra.mxu0 0
    %158 = vmatprep.subr.bf16.mxu0 0
    %159 = vmatpush1.bf16.msra.mxu0 0
    %160 = vmatprep.subr.bf16.mxu0 0
    %161 = vmatpush1.bf16.msra.mxu0 0
    %162 = vmatprep.subr.bf16.mxu0 0
    %163 = vmatpush1.bf16.msra.mxu0 0
    %164 = vmatprep.subr.bf16.mxu0 0
    %165 = vmatpush1.bf16.msra.mxu0 0
    %166 = vmatprep.subr.bf16.mxu0 0
    %167 = vmatpush1.bf16.msra.mxu0 0
    %168 = vmatprep.subr.bf16.mxu0 0
    %169 = vmatpush1.bf16.msra.mxu0 %v144
    %170 = vmatprep.subr.bf16.mxu0 0
    %171 = vmatpush2.bf16.msra.mxu0 0
    %172 = vmatprep.subr.bf16.mxu0 0
    %173 = vmatpush2.bf16.msra.mxu0 0
    %174 = vmatprep.subr.bf16.mxu0 0
    %175 = vmatpush2.bf16.msra.mxu0 0
    %176 = vmatprep.subr.bf16.mxu0 0
    %177 = vmatpush2.bf16.msra.mxu0 0
    %178 = vmatprep.subr.bf16.mxu0 0
    %179 = vmatpush2.bf16.msra.mxu0 0
    %180 = vmatprep.subr.bf16.mxu0 0
    %181 = vmatpush2.bf16.msra.mxu0 0
    %182 = vmatprep.subr.bf16.mxu0 0
    %183 = vmatpush2.bf16.msra.mxu0 0
    %184 = vmatprep.subr.bf16.mxu0 0
    %185 = vmatpush2.bf16.msra.mxu0 0
    %186 = vmatprep.mubr.bf16.mxu0 0
    %187 = vmatmul.mubr.bf16.gmra.mxu0 %v152
    %v188 = vpop.f32.mrf.mxu0
    %v189 = vadd.f32 0.0, %v188
    %v190 = vpop.f32.mrf.mxu0
    %v191 = vpop.f32.mrf.mxu0
    %v192 = vadd.f32 0.0, %v191
    %v193 = vpop.f32.mrf.mxu0
    %194 = vdwg.mxu0
    %196 = vset.pattern.permute.xlu0 0
    %197 = vperm.xlu0 %196, %v140
    %v198 = vpop.permute.xlu0 %197
    %201 = vset.pattern.permute.xlu0 0
    %202 = vperm.xlu0 %201, %v141
    %v203 = vpop.permute.xlu0 %202
    %v205 = vmul.f32 %v189, %v198
    %v206 = vmul.f32 %v192, %v203
    %v207 = vld [vmem:[#allocation5] sm:$0xf]
    %v208 = vld [vmem:[#allocation5 + $0x4] sm:$0xf]
    %v209 = vld [vmem:[#allocation5 + $0x8] sm:$0xf]
    %v210 = vld [vmem:[#allocation5 + $0xc] sm:$0xf]
    %v211 = vld [vmem:[#allocation5 + $0x10] sm:$0xf]
    %v212 = vld [vmem:[#allocation5 + $0x14] sm:$0xf]
    %v213 = vld [vmem:[#allocation5 + $0x18] sm:$0xf]
    %v214 = vld [vmem:[#allocation5 + $0x1c] sm:$0xf]
    %v215 = vld [vmem:[#allocation5 + $0x20] sm:$0xf]
    %v216 = vld [vmem:[#allocation5 + $0x24] sm:$0xf]
    %v217 = vld [vmem:[#allocation5 + $0x28] sm:$0xf]
    %v218 = vld [vmem:[#allocation5 + $0x2c] sm:$0xf]
    %v219 = vld [vmem:[#allocation5 + $0x30] sm:$0xf]
    %v220 = vld [vmem:[#allocation5 + $0x34] sm:$0xf]
    %v221 = vld [vmem:[#allocation5 + $0x38] sm:$0xf]
    %v222 = vld [vmem:[#allocation5 + $0x3c] sm:$0xf]
    %v223 = vpack.c.bf16 %v206, %v205
    %v224 = vld [vmem:[#allocation7] sm:$0xf]
    %v225 = vld [vmem:[#allocation7 + $0x4] sm:$0xf]
    %v226 = vld [vmem:[#allocation7 + $0x8] sm:$0xf]
    %v227 = vld [vmem:[#allocation7 + $0xc] sm:$0xf]
    %v228 = vld [vmem:[#allocation7 + $0x10] sm:$0xf]
    %v229 = vld [vmem:[#allocation7 + $0x14] sm:$0xf]
    %v230 = vld [vmem:[#allocation7 + $0x18] sm:$0xf]
    %v231 = vld [vmem:[#allocation7 + $0x1c] sm:$0xf]
    %v232 = vld [vmem:[#allocation7 + $0x20] sm:$0xf]
    %v233 = vld [vmem:[#allocation7 + $0x24] sm:$0xf]
    %v234 = vld [vmem:[#allocation7 + $0x28] sm:$0xf]
    %v235 = vld [vmem:[#allocation7 + $0x2c] sm:$0xf]
    %v236 = vld [vmem:[#allocation7 + $0x30] sm:$0xf]
    %v237 = vld [vmem:[#allocation7 + $0x34] sm:$0xf]
    %v238 = vld [vmem:[#allocation7 + $0x38] sm:$0xf]
    %v239 = vld [vmem:[#allocation7 + $0x3c] sm:$0xf]
    %v256 = vunpack.c.l.b16 %v224
    %v257 = vunpack.c.l.b16 %v225
    %v258 = vunpack.c.l.b16 %v226
    %v259 = vunpack.c.l.b16 %v227
    %v260 = vunpack.c.l.b16 %v228
    %v261 = vunpack.c.l.b16 %v229
    %v262 = vunpack.c.l.b16 %v230
    %v263 = vunpack.c.l.b16 %v231
    %v264 = vunpack.c.l.b16 %v232
    %v265 = vunpack.c.l.b16 %v233
    %v266 = vunpack.c.l.b16 %v234
    %v267 = vunpack.c.l.b16 %v235
    %v268 = vunpack.c.l.b16 %v236
    %v269 = vunpack.c.l.b16 %v237
    %v270 = vunpack.c.l.b16 %v238
    %v271 = vunpack.c.l.b16 %v239
    %v272 = vpack.c.b16 %v257, %v256
    %v273 = vpack.c.b16 %v259, %v258
    %v274 = vpack.c.b16 %v261, %v260
    %v275 = vpack.c.b16 %v263, %v262
    %v276 = vpack.c.b16 %v265, %v264
    %v277 = vpack.c.b16 %v267, %v266
    %v278 = vpack.c.b16 %v269, %v268
    %v279 = vpack.c.b16 %v271, %v270
    %288 = vmatprep.subr.bf16.mxu0 0
    %289 = vmatpush1.bf16.msra.mxu0 %v279
    %290 = vmatprep.subr.bf16.mxu0 0
    %291 = vmatpush1.bf16.msra.mxu0 %v278
    %292 = vmatprep.subr.bf16.mxu0 0
    %293 = vmatpush1.bf16.msra.mxu0 %v277
    %294 = vmatprep.subr.bf16.mxu0 0
    %295 = vmatpush1.bf16.msra.mxu0 %v276
    %296 = vmatprep.subr.bf16.mxu0 0
    %297 = vmatpush1.bf16.msra.mxu0 %v275
    %298 = vmatprep.subr.bf16.mxu0 0
    %299 = vmatpush1.bf16.msra.mxu0 %v274
    %300 = vmatprep.subr.bf16.mxu0 0
    %301 = vmatpush1.bf16.msra.mxu0 %v273
    %302 = vmatprep.subr.bf16.mxu0 0
    %303 = vmatpush1.bf16.msra.mxu0 %v272
    %304 = vmatprep.subr.bf16.mxu0 0
    %305 = vmatpush2.bf16.msra.mxu0 0
    %306 = vmatprep.subr.bf16.mxu0 0
    %307 = vmatpush2.bf16.msra.mxu0 0
    %308 = vmatprep.subr.bf16.mxu0 0
    %309 = vmatpush2.bf16.msra.mxu0 0
    %310 = vmatprep.subr.bf16.mxu0 0
    %311 = vmatpush2.bf16.msra.mxu0 0
    %312 = vmatprep.subr.bf16.mxu0 0
    %313 = vmatpush2.bf16.msra.mxu0 0
    %314 = vmatprep.subr.bf16.mxu0 0
    %315 = vmatpush2.bf16.msra.mxu0 0
    %316 = vmatprep.subr.bf16.mxu0 0
    %317 = vmatpush2.bf16.msra.mxu0 0
    %318 = vmatprep.subr.bf16.mxu0 0
    %319 = vmatpush2.bf16.msra.mxu0 0
    %320 = vmatprep.mubr.bf16.mxu0 0
    %321 = vmatmul.mubr.bf16.gmra.mxu0 %v223
    %v322 = vpop.f32.mrf.mxu0
    %v323 = vadd.f32 0.0, %v322
    %v324 = vpop.f32.mrf.mxu0
    %v325 = vpop.f32.mrf.mxu0
    %v326 = vadd.f32 0.0, %v325
    %v327 = vpop.f32.mrf.mxu0
    %328 = vdwg.mxu0
    %v345 = vunpack.c.l.b16 %v207
    %v346 = vunpack.c.l.b16 %v208
    %v347 = vunpack.c.l.b16 %v209
    %v348 = vunpack.c.l.b16 %v210
    %v349 = vunpack.c.l.b16 %v211
    %v350 = vunpack.c.l.b16 %v212
    %v351 = vunpack.c.l.b16 %v213
    %v352 = vunpack.c.l.b16 %v214
    %v353 = vunpack.c.l.b16 %v215
    %v354 = vunpack.c.l.b16 %v216
    %v355 = vunpack.c.l.b16 %v217
    %v356 = vunpack.c.l.b16 %v218
    %v357 = vunpack.c.l.b16 %v219
    %v358 = vunpack.c.l.b16 %v220
    %v359 = vunpack.c.l.b16 %v221
    %v360 = vunpack.c.l.b16 %v222
    %v361 = vpack.c.b16 %v346, %v345
    %v362 = vpack.c.b16 %v348, %v347
    %v363 = vpack.c.b16 %v350, %v349
    %v364 = vpack.c.b16 %v352, %v351
    %v365 = vpack.c.b16 %v354, %v353
    %v366 = vpack.c.b16 %v356, %v355
    %v367 = vpack.c.b16 %v358, %v357
    %v368 = vpack.c.b16 %v360, %v359
    %377 = vmatprep.subr.bf16.mxu0 0
    %378 = vmatpush1.bf16.msra.mxu0 %v368
    %379 = vmatprep.subr.bf16.mxu0 0
    %380 = vmatpush1.bf16.msra.mxu0 %v367
    %381 = vmatprep.subr.bf16.mxu0 0
    %382 = vmatpush1.bf16.msra.mxu0 %v366
    %383 = vmatprep.subr.bf16.mxu0 0
    %384 = vmatpush1.bf16.msra.mxu0 %v365
    %385 = vmatprep.subr.bf16.mxu0 0
    %386 = vmatpush1.bf16.msra.mxu0 %v364
    %387 = vmatprep.subr.bf16.mxu0 0
    %388 = vmatpush1.bf16.msra.mxu0 %v363
    %389 = vmatprep.subr.bf16.mxu0 0
    %390 = vmatpush1.bf16.msra.mxu0 %v362
    %391 = vmatprep.subr.bf16.mxu0 0
    %392 = vmatpush1.bf16.msra.mxu0 %v361
    %393 = vmatprep.subr.bf16.mxu0 0
    %394 = vmatpush2.bf16.msra.mxu0 0
    %395 = vmatprep.subr.bf16.mxu0 0
    %396 = vmatpush2.bf16.msra.mxu0 0
    %397 = vmatprep.subr.bf16.mxu0 0
    %398 = vmatpush2.bf16.msra.mxu0 0
    %399 = vmatprep.subr.bf16.mxu0 0
    %400 = vmatpush2.bf16.msra.mxu0 0
    %401 = vmatprep.subr.bf16.mxu0 0
    %402 = vmatpush2.bf16.msra.mxu0 0
    %403 = vmatprep.subr.bf16.mxu0 0
    %404 = vmatpush2.bf16.msra.mxu0 0
    %405 = vmatprep.subr.bf16.mxu0 0
    %406 = vmatpush2.bf16.msra.mxu0 0
    %407 = vmatprep.subr.bf16.mxu0 0
    %408 = vmatpush2.bf16.msra.mxu0 0
    %409 = vmatprep.mubr.bf16.mxu0 0
    %410 = vmatmul.mubr.bf16.gmra.mxu0 %v144
    %v411 = vpop.f32.mrf.mxu0
    %v412 = vadd.f32 %v323, %v411
    %v413 = vpop.f32.mrf.mxu0
    %v414 = vpop.f32.mrf.mxu0
    %v415 = vadd.f32 %v326, %v414
    %v416 = vpop.f32.mrf.mxu0
    %417 = vdwg.mxu0
    %v418 = vld [vmem:[%s5] sm:$0x1]
    %v420 = vlaneseq
    %v421 = vshrl.u32 %v420, 7
    %v422 = vsub.s32 0, %v421
    %v423 = vrot.slane %v418, %v422
    %v425 = vadd.f32 %v412, %v423
    %v426 = vadd.f32 %v415, %v423
    %v427 = vmax.f32 %v425, 0.0
    %v428 = vmax.f32 %v426, 0.0
    %v429 = vpack.c.bf16 %v428, %v427
    %430 = vmatprep.subr.bf16.mxu0 0
    %431 = vmatpush1.bf16.msra.mxu0 0
    %432 = vmatprep.subr.bf16.mxu0 0
    %433 = vmatpush1.bf16.msra.mxu0 0
    %434 = vmatprep.subr.bf16.mxu0 0
    %435 = vmatpush1.bf16.msra.mxu0 0
    %436 = vmatprep.subr.bf16.mxu0 0
    %437 = vmatpush1.bf16.msra.mxu0 0
    %438 = vmatprep.subr.bf16.mxu0 0
    %439 = vmatpush1.bf16.msra.mxu0 0
    %440 = vmatprep.subr.bf16.mxu0 0
    %441 = vmatpush1.bf16.msra.mxu0 0
    %442 = vmatprep.subr.bf16.mxu0 0
    %443 = vmatpush1.bf16.msra.mxu0 0
    %444 = vmatprep.subr.bf16.mxu0 0
    %445 = vmatpush1.bf16.msra.mxu0 %v429
    %446 = vmatprep.subr.bf16.mxu0 0
    %447 = vmatpush2.bf16.msra.mxu0 0
    %448 = vmatprep.subr.bf16.mxu0 0
    %449 = vmatpush2.bf16.msra.mxu0 0
    %450 = vmatprep.subr.bf16.mxu0 0
    %451 = vmatpush2.bf16.msra.mxu0 0
    %452 = vmatprep.subr.bf16.mxu0 0
    %453 = vmatpush2.bf16.msra.mxu0 0
    %454 = vmatprep.subr.bf16.mxu0 0
    %455 = vmatpush2.bf16.msra.mxu0 0
    %456 = vmatprep.subr.bf16.mxu0 0
    %457 = vmatpush2.bf16.msra.mxu0 0
    %458 = vmatprep.subr.bf16.mxu0 0
    %459 = vmatpush2.bf16.msra.mxu0 0
    %460 = vmatprep.subr.bf16.mxu0 0
    %461 = vmatpush2.bf16.msra.mxu0 0
    %462 = vmatprep.mubr.bf16.mxu0 0
    %463 = vmatmul.mubr.bf16.gmra.mxu0 %v152
    %v464 = vpop.f32.mrf.mxu0
    %v465 = vadd.f32 0.0, %v464
    %v466 = vpop.f32.mrf.mxu0
    %v467 = vpop.f32.mrf.mxu0
    %v468 = vadd.f32 0.0, %v467
    %v469 = vpop.f32.mrf.mxu0
    %470 = vdwg.mxu0
    %v471 = vmul.f32 %v465, %v198
    %v472 = vmul.f32 %v468, %v203
    %v473 = vld [vmem:[#allocation8] sm:$0xf]
    %v474 = vld [vmem:[#allocation8 + $0x4] sm:$0xf]
    %v475 = vld [vmem:[#allocation8 + $0x8] sm:$0xf]
    %v476 = vld [vmem:[#allocation8 + $0xc] sm:$0xf]
    %v477 = vld [vmem:[#allocation8 + $0x10] sm:$0xf]
    %v478 = vld [vmem:[#allocation8 + $0x14] sm:$0xf]
    %v479 = vld [vmem:[#allocation8 + $0x18] sm:$0xf]
    %v480 = vld [vmem:[#allocation8 + $0x1c] sm:$0xf]
    %v481 = vld [vmem:[#allocation8 + $0x20] sm:$0xf]
    %v482 = vld [vmem:[#allocation8 + $0x24] sm:$0xf]
    %v483 = vld [vmem:[#allocation8 + $0x28] sm:$0xf]
    %v484 = vld [vmem:[#allocation8 + $0x2c] sm:$0xf]
    %v485 = vld [vmem:[#allocation8 + $0x30] sm:$0xf]
    %v486 = vld [vmem:[#allocation8 + $0x34] sm:$0xf]
    %v487 = vld [vmem:[#allocation8 + $0x38] sm:$0xf]
    %v488 = vld [vmem:[#allocation8 + $0x3c] sm:$0xf]
    %v489 = vpack.c.bf16 %v472, %v471
    %v490 = vld [vmem:[#allocation10] sm:$0xf]
    %v491 = vld [vmem:[#allocation10 + $0x4] sm:$0xf]
    %v492 = vld [vmem:[#allocation10 + $0x8] sm:$0xf]
    %v493 = vld [vmem:[#allocation10 + $0xc] sm:$0xf]
    %v494 = vld [vmem:[#allocation10 + $0x10] sm:$0xf]
    %v495 = vld [vmem:[#allocation10 + $0x14] sm:$0xf]
    %v496 = vld [vmem:[#allocation10 + $0x18] sm:$0xf]
    %v497 = vld [vmem:[#allocation10 + $0x1c] sm:$0xf]
    %v498 = vld [vmem:[#allocation10 + $0x20] sm:$0xf]
    %v499 = vld [vmem:[#allocation10 + $0x24] sm:$0xf]
    %v500 = vld [vmem:[#allocation10 + $0x28] sm:$0xf]
    %v501 = vld [vmem:[#allocation10 + $0x2c] sm:$0xf]
    %v502 = vld [vmem:[#allocation10 + $0x30] sm:$0xf]
    %v503 = vld [vmem:[#allocation10 + $0x34] sm:$0xf]
    %v504 = vld [vmem:[#allocation10 + $0x38] sm:$0xf]
    %v505 = vld [vmem:[#allocation10 + $0x3c] sm:$0xf]
    %v522 = vunpack.c.l.b16 %v490
    %v523 = vunpack.c.l.b16 %v491
    %v524 = vunpack.c.l.b16 %v492
    %v525 = vunpack.c.l.b16 %v493
    %v526 = vunpack.c.l.b16 %v494
    %v527 = vunpack.c.l.b16 %v495
    %v528 = vunpack.c.l.b16 %v496
    %v529 = vunpack.c.l.b16 %v497
    %v530 = vunpack.c.l.b16 %v498
    %v531 = vunpack.c.l.b16 %v499
    %v532 = vunpack.c.l.b16 %v500
    %v533 = vunpack.c.l.b16 %v501
    %v534 = vunpack.c.l.b16 %v502
    %v535 = vunpack.c.l.b16 %v503
    %v536 = vunpack.c.l.b16 %v504
    %v537 = vunpack.c.l.b16 %v505
    %v538 = vpack.c.b16 %v523, %v522
    %v539 = vpack.c.b16 %v525, %v524
    %v540 = vpack.c.b16 %v527, %v526
    %v541 = vpack.c.b16 %v529, %v528
    %v542 = vpack.c.b16 %v531, %v530
    %v543 = vpack.c.b16 %v533, %v532
    %v544 = vpack.c.b16 %v535, %v534
    %v545 = vpack.c.b16 %v537, %v536
    %554 = vmatprep.subr.bf16.mxu0 0
    %555 = vmatpush1.bf16.msra.mxu0 %v545
    %556 = vmatprep.subr.bf16.mxu0 0
    %557 = vmatpush1.bf16.msra.mxu0 %v544
    %558 = vmatprep.subr.bf16.mxu0 0
    %559 = vmatpush1.bf16.msra.mxu0 %v543
    %560 = vmatprep.subr.bf16.mxu0 0
    %561 = vmatpush1.bf16.msra.mxu0 %v542
    %562 = vmatprep.subr.bf16.mxu0 0
    %563 = vmatpush1.bf16.msra.mxu0 %v541
    %564 = vmatprep.subr.bf16.mxu0 0
    %565 = vmatpush1.bf16.msra.mxu0 %v540
    %566 = vmatprep.subr.bf16.mxu0 0
    %567 = vmatpush1.bf16.msra.mxu0 %v539
    %568 = vmatprep.subr.bf16.mxu0 0
    %569 = vmatpush1.bf16.msra.mxu0 %v538
    %570 = vmatprep.subr.bf16.mxu0 0
    %571 = vmatpush2.bf16.msra.mxu0 0
    %572 = vmatprep.subr.bf16.mxu0 0
    %573 = vmatpush2.bf16.msra.mxu0 0
    %574 = vmatprep.subr.bf16.mxu0 0
    %575 = vmatpush2.bf16.msra.mxu0 0
    %576 = vmatprep.subr.bf16.mxu0 0
    %577 = vmatpush2.bf16.msra.mxu0 0
    %578 = vmatprep.subr.bf16.mxu0 0
    %579 = vmatpush2.bf16.msra.mxu0 0
    %580 = vmatprep.subr.bf16.mxu0 0
    %581 = vmatpush2.bf16.msra.mxu0 0
    %582 = vmatprep.subr.bf16.mxu0 0
    %583 = vmatpush2.bf16.msra.mxu0 0
    %584 = vmatprep.subr.bf16.mxu0 0
    %585 = vmatpush2.bf16.msra.mxu0 0
    %586 = vmatprep.mubr.bf16.mxu0 0
    %587 = vmatmul.mubr.bf16.gmra.mxu0 %v489
    %v588 = vpop.f32.mrf.mxu0
    %v589 = vadd.f32 0.0, %v588
    %v590 = vpop.f32.mrf.mxu0
    %v591 = vpop.f32.mrf.mxu0
    %v592 = vadd.f32 0.0, %v591
    %v593 = vpop.f32.mrf.mxu0
    %594 = vdwg.mxu0
    %v611 = vunpack.c.l.b16 %v473
    %v612 = vunpack.c.l.b16 %v474
    %v613 = vunpack.c.l.b16 %v475
    %v614 = vunpack.c.l.b16 %v476
    %v615 = vunpack.c.l.b16 %v477
    %v616 = vunpack.c.l.b16 %v478
    %v617 = vunpack.c.l.b16 %v479
    %v618 = vunpack.c.l.b16 %v480
    %v619 = vunpack.c.l.b16 %v481
    %v620 = vunpack.c.l.b16 %v482
    %v621 = vunpack.c.l.b16 %v483
    %v622 = vunpack.c.l.b16 %v484
    %v623 = vunpack.c.l.b16 %v485
    %v624 = vunpack.c.l.b16 %v486
    %v625 = vunpack.c.l.b16 %v487
    %v626 = vunpack.c.l.b16 %v488
    %v627 = vpack.c.b16 %v612, %v611
    %v628 = vpack.c.b16 %v614, %v613
    %v629 = vpack.c.b16 %v616, %v615
    %v630 = vpack.c.b16 %v618, %v617
    %v631 = vpack.c.b16 %v620, %v619
    %v632 = vpack.c.b16 %v622, %v621
    %v633 = vpack.c.b16 %v624, %v623
    %v634 = vpack.c.b16 %v626, %v625
    %643 = vmatprep.subr.bf16.mxu0 0
    %644 = vmatpush1.bf16.msra.mxu0 %v634
    %645 = vmatprep.subr.bf16.mxu0 0
    %646 = vmatpush1.bf16.msra.mxu0 %v633
    %647 = vmatprep.subr.bf16.mxu0 0
    %648 = vmatpush1.bf16.msra.mxu0 %v632
    %649 = vmatprep.subr.bf16.mxu0 0
    %650 = vmatpush1.bf16.msra.mxu0 %v631
    %651 = vmatprep.subr.bf16.mxu0 0
    %652 = vmatpush1.bf16.msra.mxu0 %v630
    %653 = vmatprep.subr.bf16.mxu0 0
    %654 = vmatpush1.bf16.msra.mxu0 %v629
    %655 = vmatprep.subr.bf16.mxu0 0
    %656 = vmatpush1.bf16.msra.mxu0 %v628
    %657 = vmatprep.subr.bf16.mxu0 0
    %658 = vmatpush1.bf16.msra.mxu0 %v627
    %659 = vmatprep.subr.bf16.mxu0 0
    %660 = vmatpush2.bf16.msra.mxu0 0
    %661 = vmatprep.subr.bf16.mxu0 0
    %662 = vmatpush2.bf16.msra.mxu0 0
    %663 = vmatprep.subr.bf16.mxu0 0
    %664 = vmatpush2.bf16.msra.mxu0 0
    %665 = vmatprep.subr.bf16.mxu0 0
    %666 = vmatpush2.bf16.msra.mxu0 0
    %667 = vmatprep.subr.bf16.mxu0 0
    %668 = vmatpush2.bf16.msra.mxu0 0
    %669 = vmatprep.subr.bf16.mxu0 0
    %670 = vmatpush2.bf16.msra.mxu0 0
    %671 = vmatprep.subr.bf16.mxu0 0
    %672 = vmatpush2.bf16.msra.mxu0 0
    %673 = vmatprep.subr.bf16.mxu0 0
    %674 = vmatpush2.bf16.msra.mxu0 0
    %675 = vmatprep.mubr.bf16.mxu0 0
    %676 = vmatmul.mubr.bf16.gmra.mxu0 %v429
    %v677 = vpop.f32.mrf.mxu0
    %v678 = vadd.f32 %v589, %v677
    %v679 = vpop.f32.mrf.mxu0
    %v680 = vpop.f32.mrf.mxu0
    %v681 = vadd.f32 %v592, %v680
    %v682 = vpop.f32.mrf.mxu0
    %683 = vdwg.mxu0
    %v684 = vld [vmem:[%s8] sm:$0x1]
    %v686 = vlaneseq
    %v687 = vshrl.u32 %v686, 7
    %v688 = vsub.s32 0, %v687
    %v689 = vrot.slane %v684, %v688
    %v691 = vadd.f32 %v678, %v689
    %v692 = vadd.f32 %v681, %v689
    %v693 = vmax.f32 %v691, 0.0
    %v694 = vmax.f32 %v692, 0.0
    %v695 = vpack.c.bf16 %v694, %v693
    %696 = vmatprep.subr.bf16.mxu0 0
    %697 = vmatpush1.bf16.msra.mxu0 0
    %698 = vmatprep.subr.bf16.mxu0 0
    %699 = vmatpush1.bf16.msra.mxu0 0
    %700 = vmatprep.subr.bf16.mxu0 0
    %701 = vmatpush1.bf16.msra.mxu0 0
    %702 = vmatprep.subr.bf16.mxu0 0
    %703 = vmatpush1.bf16.msra.mxu0 0
    %704 = vmatprep.subr.bf16.mxu0 0
    %705 = vmatpush1.bf16.msra.mxu0 0
    %706 = vmatprep.subr.bf16.mxu0 0
    %707 = vmatpush1.bf16.msra.mxu0 0
    %708 = vmatprep.subr.bf16.mxu0 0
    %709 = vmatpush1.bf16.msra.mxu0 0
    %710 = vmatprep.subr.bf16.mxu0 0
    %711 = vmatpush1.bf16.msra.mxu0 %v695
    %712 = vmatprep.subr.bf16.mxu0 0
    %713 = vmatpush2.bf16.msra.mxu0 0
    %714 = vmatprep.subr.bf16.mxu0 0
    %715 = vmatpush2.bf16.msra.mxu0 0
    %716 = vmatprep.subr.bf16.mxu0 0
    %717 = vmatpush2.bf16.msra.mxu0 0
    %718 = vmatprep.subr.bf16.mxu0 0
    %719 = vmatpush2.bf16.msra.mxu0 0
    %720 = vmatprep.subr.bf16.mxu0 0
    %721 = vmatpush2.bf16.msra.mxu0 0
    %722 = vmatprep.subr.bf16.mxu0 0
    %723 = vmatpush2.bf16.msra.mxu0 0
    %724 = vmatprep.subr.bf16.mxu0 0
    %725 = vmatpush2.bf16.msra.mxu0 0
    %726 = vmatprep.subr.bf16.mxu0 0
    %727 = vmatpush2.bf16.msra.mxu0 0
    %728 = vmatprep.mubr.bf16.mxu0 0
    %729 = vmatmul.mubr.bf16.gmra.mxu0 %v152
    %v730 = vpop.f32.mrf.mxu0
    %v731 = vadd.f32 0.0, %v730
    %v732 = vpop.f32.mrf.mxu0
    %v733 = vpop.f32.mrf.mxu0
    %v734 = vadd.f32 0.0, %v733
    %v735 = vpop.f32.mrf.mxu0
    %736 = vdwg.mxu0
    %v737 = vmul.f32 %v731, %v198
    %v738 = vmul.f32 %v734, %v203
    %v739 = vld [vmem:[#allocation11] sm:$0xf]
    %v740 = vld [vmem:[#allocation11 + $0x4] sm:$0xf]
    %v741 = vld [vmem:[#allocation11 + $0x8] sm:$0xf]
    %v742 = vld [vmem:[#allocation11 + $0xc] sm:$0xf]
    %v743 = vld [vmem:[#allocation11 + $0x10] sm:$0xf]
    %v744 = vld [vmem:[#allocation11 + $0x14] sm:$0xf]
    %v745 = vld [vmem:[#allocation11 + $0x18] sm:$0xf]
    %v746 = vld [vmem:[#allocation11 + $0x1c] sm:$0xf]
    %v747 = vld [vmem:[#allocation11 + $0x20] sm:$0xf]
    %v748 = vld [vmem:[#allocation11 + $0x24] sm:$0xf]
    %v749 = vld [vmem:[#allocation11 + $0x28] sm:$0xf]
    %v750 = vld [vmem:[#allocation11 + $0x2c] sm:$0xf]
    %v751 = vld [vmem:[#allocation11 + $0x30] sm:$0xf]
    %v752 = vld [vmem:[#allocation11 + $0x34] sm:$0xf]
    %v753 = vld [vmem:[#allocation11 + $0x38] sm:$0xf]
    %v754 = vld [vmem:[#allocation11 + $0x3c] sm:$0xf]
    %v755 = vpack.c.bf16 %v738, %v737
    %v756 = vld [vmem:[#allocation13] sm:$0xf]
    %v757 = vld [vmem:[#allocation13 + $0x4] sm:$0xf]
    %v758 = vld [vmem:[#allocation13 + $0x8] sm:$0xf]
    %v759 = vld [vmem:[#allocation13 + $0xc] sm:$0xf]
    %v760 = vld [vmem:[#allocation13 + $0x10] sm:$0xf]
    %v761 = vld [vmem:[#allocation13 + $0x14] sm:$0xf]
    %v762 = vld [vmem:[#allocation13 + $0x18] sm:$0xf]
    %v763 = vld [vmem:[#allocation13 + $0x1c] sm:$0xf]
    %v764 = vld [vmem:[#allocation13 + $0x20] sm:$0xf]
    %v765 = vld [vmem:[#allocation13 + $0x24] sm:$0xf]
    %v766 = vld [vmem:[#allocation13 + $0x28] sm:$0xf]
    %v767 = vld [vmem:[#allocation13 + $0x2c] sm:$0xf]
    %v768 = vld [vmem:[#allocation13 + $0x30] sm:$0xf]
    %v769 = vld [vmem:[#allocation13 + $0x34] sm:$0xf]
    %v770 = vld [vmem:[#allocation13 + $0x38] sm:$0xf]
    %v771 = vld [vmem:[#allocation13 + $0x3c] sm:$0xf]
    %v788 = vunpack.c.l.b16 %v756
    %v789 = vunpack.c.l.b16 %v757
    %v790 = vunpack.c.l.b16 %v758
    %v791 = vunpack.c.l.b16 %v759
    %v792 = vunpack.c.l.b16 %v760
    %v793 = vunpack.c.l.b16 %v761
    %v794 = vunpack.c.l.b16 %v762
    %v795 = vunpack.c.l.b16 %v763
    %v796 = vunpack.c.l.b16 %v764
    %v797 = vunpack.c.l.b16 %v765
    %v798 = vunpack.c.l.b16 %v766
    %v799 = vunpack.c.l.b16 %v767
    %v800 = vunpack.c.l.b16 %v768
    %v801 = vunpack.c.l.b16 %v769
    %v802 = vunpack.c.l.b16 %v770
    %v803 = vunpack.c.l.b16 %v771
    %v804 = vpack.c.b16 %v789, %v788
    %v805 = vpack.c.b16 %v791, %v790
    %v806 = vpack.c.b16 %v793, %v792
    %v807 = vpack.c.b16 %v795, %v794
    %v808 = vpack.c.b16 %v797, %v796
    %v809 = vpack.c.b16 %v799, %v798
    %v810 = vpack.c.b16 %v801, %v800
    %v811 = vpack.c.b16 %v803, %v802
    %820 = vmatprep.subr.bf16.mxu0 0
    %821 = vmatpush1.bf16.msra.mxu0 %v811
    %822 = vmatprep.subr.bf16.mxu0 0
    %823 = vmatpush1.bf16.msra.mxu0 %v810
    %824 = vmatprep.subr.bf16.mxu0 0
    %825 = vmatpush1.bf16.msra.mxu0 %v809
    %826 = vmatprep.subr.bf16.mxu0 0
    %827 = vmatpush1.bf16.msra.mxu0 %v808
    %828 = vmatprep.subr.bf16.mxu0 0
    %829 = vmatpush1.bf16.msra.mxu0 %v807
    %830 = vmatprep.subr.bf16.mxu0 0
    %831 = vmatpush1.bf16.msra.mxu0 %v806
    %832 = vmatprep.subr.bf16.mxu0 0
    %833 = vmatpush1.bf16.msra.mxu0 %v805
    %834 = vmatprep.subr.bf16.mxu0 0
    %835 = vmatpush1.bf16.msra.mxu0 %v804
    %836 = vmatprep.subr.bf16.mxu0 0
    %837 = vmatpush2.bf16.msra.mxu0 0
    %838 = vmatprep.subr.bf16.mxu0 0
    %839 = vmatpush2.bf16.msra.mxu0 0
    %840 = vmatprep.subr.bf16.mxu0 0
    %841 = vmatpush2.bf16.msra.mxu0 0
    %842 = vmatprep.subr.bf16.mxu0 0
    %843 = vmatpush2.bf16.msra.mxu0 0
    %844 = vmatprep.subr.bf16.mxu0 0
    %845 = vmatpush2.bf16.msra.mxu0 0
    %846 = vmatprep.subr.bf16.mxu0 0
    %847 = vmatpush2.bf16.msra.mxu0 0
    %848 = vmatprep.subr.bf16.mxu0 0
    %849 = vmatpush2.bf16.msra.mxu0 0
    %850 = vmatprep.subr.bf16.mxu0 0
    %851 = vmatpush2.bf16.msra.mxu0 0
    %852 = vmatprep.mubr.bf16.mxu0 0
    %853 = vmatmul.mubr.bf16.gmra.mxu0 %v755
    %v854 = vpop.f32.mrf.mxu0
    %v855 = vadd.f32 0.0, %v854
    %v856 = vpop.f32.mrf.mxu0
    %v857 = vpop.f32.mrf.mxu0
    %v858 = vadd.f32 0.0, %v857
    %v859 = vpop.f32.mrf.mxu0
    %860 = vdwg.mxu0
    %v877 = vunpack.c.l.b16 %v739
    %v878 = vunpack.c.l.b16 %v740
    %v879 = vunpack.c.l.b16 %v741
    %v880 = vunpack.c.l.b16 %v742
    %v881 = vunpack.c.l.b16 %v743
    %v882 = vunpack.c.l.b16 %v744
    %v883 = vunpack.c.l.b16 %v745
    %v884 = vunpack.c.l.b16 %v746
    %v885 = vunpack.c.l.b16 %v747
    %v886 = vunpack.c.l.b16 %v748
    %v887 = vunpack.c.l.b16 %v749
    %v888 = vunpack.c.l.b16 %v750
    %v889 = vunpack.c.l.b16 %v751
    %v890 = vunpack.c.l.b16 %v752
    %v891 = vunpack.c.l.b16 %v753
    %v892 = vunpack.c.l.b16 %v754
    %v893 = vpack.c.b16 %v878, %v877
    %v894 = vpack.c.b16 %v880, %v879
    %v895 = vpack.c.b16 %v882, %v881
    %v896 = vpack.c.b16 %v884, %v883
    %v897 = vpack.c.b16 %v886, %v885
    %v898 = vpack.c.b16 %v888, %v887
    %v899 = vpack.c.b16 %v890, %v889
    %v900 = vpack.c.b16 %v892, %v891
    %909 = vmatprep.subr.bf16.mxu0 0
    %910 = vmatpush1.bf16.msra.mxu0 %v900
    %911 = vmatprep.subr.bf16.mxu0 0
    %912 = vmatpush1.bf16.msra.mxu0 %v899
    %913 = vmatprep.subr.bf16.mxu0 0
    %914 = vmatpush1.bf16.msra.mxu0 %v898
    %915 = vmatprep.subr.bf16.mxu0 0
    %916 = vmatpush1.bf16.msra.mxu0 %v897
    %917 = vmatprep.subr.bf16.mxu0 0
    %918 = vmatpush1.bf16.msra.mxu0 %v896
    %919 = vmatprep.subr.bf16.mxu0 0
    %920 = vmatpush1.bf16.msra.mxu0 %v895
    %921 = vmatprep.subr.bf16.mxu0 0
    %922 = vmatpush1.bf16.msra.mxu0 %v894
    %923 = vmatprep.subr.bf16.mxu0 0
    %924 = vmatpush1.bf16.msra.mxu0 %v893
    %925 = vmatprep.subr.bf16.mxu0 0
    %926 = vmatpush2.bf16.msra.mxu0 0
    %927 = vmatprep.subr.bf16.mxu0 0
    %928 = vmatpush2.bf16.msra.mxu0 0
    %929 = vmatprep.subr.bf16.mxu0 0
    %930 = vmatpush2.bf16.msra.mxu0 0
    %931 = vmatprep.subr.bf16.mxu0 0
    %932 = vmatpush2.bf16.msra.mxu0 0
    %933 = vmatprep.subr.bf16.mxu0 0
    %934 = vmatpush2.bf16.msra.mxu0 0
    %935 = vmatprep.subr.bf16.mxu0 0
    %936 = vmatpush2.bf16.msra.mxu0 0
    %937 = vmatprep.subr.bf16.mxu0 0
    %938 = vmatpush2.bf16.msra.mxu0 0
    %939 = vmatprep.subr.bf16.mxu0 0
    %940 = vmatpush2.bf16.msra.mxu0 0
    %941 = vmatprep.mubr.bf16.mxu0 0
    %942 = vmatmul.mubr.bf16.gmra.mxu0 %v695
    %v943 = vpop.f32.mrf.mxu0
    %v944 = vadd.f32 %v855, %v943
    %v945 = vpop.f32.mrf.mxu0
    %v946 = vpop.f32.mrf.mxu0
    %v947 = vadd.f32 %v858, %v946
    %v948 = vpop.f32.mrf.mxu0
    %949 = vdwg.mxu0
    %v950 = vld [vmem:[%s11] sm:$0x1]
    %v952 = vlaneseq
    %v953 = vshrl.u32 %v952, 7
    %v954 = vsub.s32 0, %v953
    %v955 = vrot.slane %v950, %v954
    %v957 = vadd.f32 %v944, %v955
    %v958 = vadd.f32 %v947, %v955
    %959 = vst [vmem:[#allocation14] sm:$0xff] %v957
    %960 = vst [vmem:[#allocation14 + $0x8] sm:$0xff] %v958
    // Predicated region
    $region78: #{tpu_custom_call.1} parent=1 // pred_check
      _
    $region79: #{tpu_custom_call.1} parent=1 // pred_check_branch
      %962 = sbr.rel (0) target = $region81
    $region80: #{tpu_custom_call.1} parent=1 // pred_region
      %s964 = ssub.s32 256, 256
      %965 = vsyncadd [#allocation4], %s964
      %s966 = sshll.u32 [#allocation14], 4
      %s967 = int_to_ptr.vmem [resolvable:$true] %s966
      %972 = dma.vmem_to_hbm [thread:$0]  %s967, 256, %s12, [#allocation4], 128, 128, 8
    $region81: #{tpu_custom_call.1} parent=1 // pred_fallthru
      _
    // Predicated region
    $region82: #{tpu_custom_call.1} parent=1 // pred_check
      _
    $region83: #{tpu_custom_call.1} parent=1 // pred_check_branch
      %974 = sbr.rel (0) target = $region85
    $region84: #{tpu_custom_call.1} parent=1 // pred_region
      %975 = dma.done [#allocation4], 256
    $region85: #{tpu_custom_call.1} parent=1 // pred_fallthru
      _
    %976 = vsyncpa [#allocation3], 1
    %977 = vsyncpa [#allocation6], 1
    %978 = vsyncpa [#allocation9], 1
    %979 = vsyncpa [#allocation12], 1
    %980 = vsyncpa [#allocation4], 1

</llo_original>
